<compile_context>
chip_gen: v6e
topology: v6e:2x2x1
jax: 0.10.0
libtpu: 0.0.40
codegen_flags: <defaults>
</compile_context>

<pallas_src>
import functools
import math

import jax
import jax.numpy as jnp
from jax.experimental import pallas as pl
from jax.experimental.pallas import tpu as pltpu


# ----------------------------- Pallas kernel -------------------------------

def _mlp_fused_kernel(*refs, num_layers):
    """refs = (x_ref, w0, b0, w1, b1, ..., w_last, b_last, o_ref).

    Computes the full MLP chain on one row-tile of x, keeping every
    intermediate activation in registers/VMEM.  ReLU6 is fused after every
    layer except the last (dropout is identity at inference).
    """
    x_ref = refs[0]
    o_ref = refs[-1]
    wb = refs[1:-1]

    h = x_ref[...].astype(jnp.float32)
    for i in range(num_layers):
        w = wb[2 * i][...]
        b = wb[2 * i + 1][...]
        h = jnp.dot(h, w, preferred_element_type=jnp.float32) + b
        if i < num_layers - 1:
            # TODO(synk): training-mode nn.Dropout(0.1) (stochastic masking +
            # 1/(1-p) scaling) is not implemented; inference semantics only.
            h = jnp.clip(h, 0.0, 6.0)          # ReLU6
    o_ref[...] = h.astype(o_ref.dtype)


# ------------------------------- wrapper ------------------------------------

def mlp_forward(x, weights, biases, *, tm=128):
    """x: (..., D_in); weights[i]: (sizes[i], sizes[i+1]); biases[i]: (sizes[i+1],)."""
    assert len(weights) == len(biases) and len(weights) >= 1
    lead = x.shape[:-1]
    d_in = x.shape[-1]
    m = int(math.prod(lead)) if lead else 1
    x2 = x.reshape(m, d_in).astype(jnp.float32)

    num_layers = len(weights)
    d_out = weights[-1].shape[1]

    tm = min(tm, m)
    assert m % tm == 0, "row count must be divisible by the row tile"
    grid = (m // tm,)

    in_specs = [pl.BlockSpec((tm, d_in), lambda i: (i, 0))]
    args = [x2]
    for w, b in zip(weights, biases):
        k, n = w.shape
        assert b.shape == (n,)
        # Full-array weight / bias blocks; constant index_map => loaded once,
        # not re-DMA'd every grid step.
        in_specs.append(pl.BlockSpec((k, n), lambda i: (0, 0)))
        in_specs.append(pl.BlockSpec((1, n), lambda i: (0, 0)))
        args.append(w.astype(jnp.float32))
        args.append(b.reshape(1, n).astype(jnp.float32))

    out = pl.pallas_call(
        functools.partial(_mlp_fused_kernel, num_layers=num_layers),
        out_shape=jax.ShapeDtypeStruct((m, d_out), jnp.float32),
        grid=grid,
        in_specs=in_specs,
        out_specs=pl.BlockSpec((tm, d_out), lambda i: (i, 0)),
        compiler_params=pltpu.CompilerParams(
            dimension_semantics=("parallel",),   # independent row tiles -> 2 TCs on v7x
        ),
    )(*args)
    return out.reshape(*lead, d_out)


# --------------------------- parameter creation -----------------------------

def init_params(key, sizes):
    weights, biases = [], []
    ks = iter(jax.random.split(key, 2 * (len(sizes) - 1)))
    for i in range(len(sizes) - 1):
        fan_in = sizes[i]
        bound = 1.0 / math.sqrt(fan_in)            # nn.Linear default init range
        w = jax.random.uniform(next(ks), (sizes[i], sizes[i + 1]),
                               jnp.float32, -bound, bound)
        b = jax.random.uniform(next(ks), (sizes[i + 1],),
                               jnp.float32, -bound, bound)
        weights.append(w)
        biases.append(b)
    return weights, biases


# ------------------------------ pure-JAX ref ---------------------------------

def reference_mlp(x, weights, biases):
    h = x.astype(jnp.float32)
    for i, (w, b) in enumerate(zip(weights, biases)):
        h = h @ w + b
        if i < len(weights) - 1:
            h = jnp.clip(h, 0.0, 6.0)
    return h


# ---------------------------------- main -------------------------------------

if __name__ == "__main__":
    # sizes of the MLP; batch=2, seq=128 -> 256 rows of width 32.
    sizes = [32, 128, 128, 64]
    B, S = 2, 128

    root = jax.random.PRNGKey(0)
    kp, kx = jax.random.split(root)
    weights, biases = init_params(kp, sizes)
    x = jax.random.normal(kx, (B, S, sizes[0]), jnp.float32)

    out = mlp_forward(x, weights, biases, tm=128)
    out = jax.block_until_ready(out)
    assert out.shape == (B, S, sizes[-1])
    assert bool(jnp.all(jnp.isfinite(out)))

    with jax.default_matmul_precision("highest"):
        ref = jax.block_until_ready(reference_mlp(x, weights, biases))
    max_err = float(jnp.max(jnp.abs(out - ref)))
    assert max_err < 1e-3, f"mismatch vs reference: {max_err}"

    print("KERNEL_OK")
</pallas_src>

<mosaic_0001>
module attributes {stable_mosaic.version = 11 : i64} {
  func.func @_mlp_fused_kernel(%arg0: i32, %arg1: memref<128x32xf32, #tpu.memory_space<vmem>>, %arg2: memref<32x128xf32, #tpu.memory_space<vmem>>, %arg3: memref<1x128xf32, #tpu.memory_space<vmem>>, %arg4: memref<128x128xf32, #tpu.memory_space<vmem>>, %arg5: memref<1x128xf32, #tpu.memory_space<vmem>>, %arg6: memref<128x64xf32, #tpu.memory_space<vmem>>, %arg7: memref<1x64xf32, #tpu.memory_space<vmem>>, %arg8: memref<128x64xf32, #tpu.memory_space<vmem>>) attributes {dimension_semantics = [#tpu.dimension_semantics<parallel>], iteration_bounds = array<i64: 2>, scalar_prefetch = 0 : i64, scratch_operands = 0 : i64, tpu.core_type = #tpu.core_type<tc>, window_params = [{transform_indices = @transform_0, window_bounds = array<i64: 128, 32>}, {pipeline_mode = #tpu.pipeline_mode<synchronous>, transform_indices = @transform_1, window_bounds = array<i64: 32, 128>}, {pipeline_mode = #tpu.pipeline_mode<synchronous>, transform_indices = @transform_2, window_bounds = array<i64: 1, 128>}, {pipeline_mode = #tpu.pipeline_mode<synchronous>, transform_indices = @transform_3, window_bounds = array<i64: 128, 128>}, {pipeline_mode = #tpu.pipeline_mode<synchronous>, transform_indices = @transform_4, window_bounds = array<i64: 1, 128>}, {pipeline_mode = #tpu.pipeline_mode<synchronous>, transform_indices = @transform_5, window_bounds = array<i64: 128, 64>}, {pipeline_mode = #tpu.pipeline_mode<synchronous>, transform_indices = @transform_6, window_bounds = array<i64: 1, 64>}, {transform_indices = @transform_7, window_bounds = array<i64: 128, 64>}]} {
    %c0 = arith.constant 0 : index
    %c0_0 = arith.constant 0 : index
    %0 = vector.load %arg1[%c0, %c0_0] : memref<128x32xf32, #tpu.memory_space<vmem>>, vector<128x32xf32>
    %c0_1 = arith.constant 0 : index
    %c0_2 = arith.constant 0 : index
    %1 = vector.load %arg2[%c0_1, %c0_2] : memref<32x128xf32, #tpu.memory_space<vmem>>, vector<32x128xf32>
    %c0_3 = arith.constant 0 : index
    %c0_4 = arith.constant 0 : index
    %2 = vector.load %arg3[%c0_3, %c0_4] : memref<1x128xf32, #tpu.memory_space<vmem>>, vector<1x128xf32>
    %cst = arith.constant dense<0.000000e+00> : vector<128x128xf32>
    %3 = tpu.matmul %0, %1, %cst {dimension_numbers = #tpu.dot_dimension_numbers<[1], [0], [0], [1], [0, 0, 1, 1], [], []>} : vector<128x32xf32>, vector<32x128xf32>, vector<128x128xf32> -> vector<128x128xf32>
    %4 = vector.broadcast %2 : vector<1x128xf32> to vector<128x128xf32>
    %5 = arith.addf %3, %4 : vector<128x128xf32>
    %cst_5 = arith.constant 0.000000e+00 : f32
    %cst_6 = arith.constant 6.000000e+00 : f32
    %6 = vector.broadcast %cst_5 : f32 to vector<128x128xf32>
    %7 = arith.maximumf %6, %5 : vector<128x128xf32>
    %8 = vector.broadcast %cst_6 : f32 to vector<128x128xf32>
    %9 = arith.minimumf %8, %7 : vector<128x128xf32>
    %c0_7 = arith.constant 0 : index
    %c0_8 = arith.constant 0 : index
    %10 = vector.load %arg4[%c0_7, %c0_8] : memref<128x128xf32, #tpu.memory_space<vmem>>, vector<128x128xf32>
    %c0_9 = arith.constant 0 : index
    %c0_10 = arith.constant 0 : index
    %11 = vector.load %arg5[%c0_9, %c0_10] : memref<1x128xf32, #tpu.memory_space<vmem>>, vector<1x128xf32>
    %cst_11 = arith.constant dense<0.000000e+00> : vector<128x128xf32>
    %12 = tpu.matmul %9, %10, %cst_11 {dimension_numbers = #tpu.dot_dimension_numbers<[1], [0], [0], [1], [0, 0, 1, 1], [], []>} : vector<128x128xf32>, vector<128x128xf32>, vector<128x128xf32> -> vector<128x128xf32>
    %13 = vector.broadcast %11 : vector<1x128xf32> to vector<128x128xf32>
    %14 = arith.addf %12, %13 : vector<128x128xf32>
    %cst_12 = arith.constant 0.000000e+00 : f32
    %cst_13 = arith.constant 6.000000e+00 : f32
    %15 = vector.broadcast %cst_12 : f32 to vector<128x128xf32>
    %16 = arith.maximumf %15, %14 : vector<128x128xf32>
    %17 = vector.broadcast %cst_13 : f32 to vector<128x128xf32>
    %18 = arith.minimumf %17, %16 : vector<128x128xf32>
    %c0_14 = arith.constant 0 : index
    %c0_15 = arith.constant 0 : index
    %19 = vector.load %arg6[%c0_14, %c0_15] : memref<128x64xf32, #tpu.memory_space<vmem>>, vector<128x64xf32>
    %c0_16 = arith.constant 0 : index
    %c0_17 = arith.constant 0 : index
    %20 = vector.load %arg7[%c0_16, %c0_17] : memref<1x64xf32, #tpu.memory_space<vmem>>, vector<1x64xf32>
    %cst_18 = arith.constant dense<0.000000e+00> : vector<128x64xf32>
    %21 = tpu.matmul %18, %19, %cst_18 {dimension_numbers = #tpu.dot_dimension_numbers<[1], [0], [0], [1], [0, 0, 1, 1], [], []>} : vector<128x128xf32>, vector<128x64xf32>, vector<128x64xf32> -> vector<128x64xf32>
    %22 = vector.broadcast %20 : vector<1x64xf32> to vector<128x64xf32>
    %23 = arith.addf %21, %22 : vector<128x64xf32>
    %c0_19 = arith.constant 0 : index
    %c0_20 = arith.constant 0 : index
    %24 = vector.load %arg8[%c0_19, %c0_20] : memref<128x64xf32, #tpu.memory_space<vmem>>, vector<128x64xf32>
    tpu.vector_store %arg8[%c0_19, %c0_20], %23 {strides = array<i32>} : memref<128x64xf32, #tpu.memory_space<vmem>>, vector<128x64xf32>,
    return
  }
  func.func @transform_0(%arg0: i32) -> (i32, i32) {
    %c0_i32 = arith.constant 0 : i32
    %c0_i32_0 = arith.constant 0 : i32
    return %arg0, %c0_i32 : i32, i32
  }
  func.func @transform_1(%arg0: i32) -> (i32, i32) {
    %c0_i32 = arith.constant 0 : i32
    %c0_i32_0 = arith.constant 0 : i32
    %c0_i32_1 = arith.constant 0 : i32
    return %c0_i32, %c0_i32_0 : i32, i32
  }
  func.func @transform_2(%arg0: i32) -> (i32, i32) {
    %c0_i32 = arith.constant 0 : i32
    %c0_i32_0 = arith.constant 0 : i32
    %c0_i32_1 = arith.constant 0 : i32
    return %c0_i32, %c0_i32_0 : i32, i32
  }
  func.func @transform_3(%arg0: i32) -> (i32, i32) {
    %c0_i32 = arith.constant 0 : i32
    %c0_i32_0 = arith.constant 0 : i32
    %c0_i32_1 = arith.constant 0 : i32
    return %c0_i32, %c0_i32_0 : i32, i32
  }
  func.func @transform_4(%arg0: i32) -> (i32, i32) {
    %c0_i32 = arith.constant 0 : i32
    %c0_i32_0 = arith.constant 0 : i32
    %c0_i32_1 = arith.constant 0 : i32
    return %c0_i32, %c0_i32_0 : i32, i32
  }
  func.func @transform_5(%arg0: i32) -> (i32, i32) {
    %c0_i32 = arith.constant 0 : i32
    %c0_i32_0 = arith.constant 0 : i32
    %c0_i32_1 = arith.constant 0 : i32
    return %c0_i32, %c0_i32_0 : i32, i32
  }
  func.func @transform_6(%arg0: i32) -> (i32, i32) {
    %c0_i32 = arith.constant 0 : i32
    %c0_i32_0 = arith.constant 0 : i32
    %c0_i32_1 = arith.constant 0 : i32
    return %c0_i32, %c0_i32_0 : i32, i32
  }
  func.func @transform_7(%arg0: i32) -> (i32, i32) {
    %c0_i32 = arith.constant 0 : i32
    %c0_i32_0 = arith.constant 0 : i32
    return %arg0, %c0_i32 : i32, i32
  }
}

</mosaic_0001>

<llo_original>
// kernel: tpu_custom_call.1
$region0: #{tpu_custom_call.1}
  #allocation0 [shape = 'u32[]', space=smem, size = 0x4, offset = 0x4, fixed_abs, tag = 'smem constant byte address 0x4 - core index']
  #allocation1 [shape = 'u32[144,128]{1,0:T(1,128)}', space=vmem, size = 0x12000, scoped, tag = 'internal scratch']
  %s0 = inlined_call_operand.vmem [shape: f32[256,32], index: 0, kind: input, shape index: {}]
  %s1 = inlined_call_operand.vmem [shape: f32[32,128], index: 1, kind: input, shape index: {}]
  %s2 = inlined_call_operand.vmem [shape: f32[1,128], index: 2, kind: input, shape index: {}]
  %s3 = inlined_call_operand.vmem [shape: f32[128,128], index: 3, kind: input, shape index: {}]
  %s4 = inlined_call_operand.vmem [shape: f32[1,128], index: 4, kind: input, shape index: {}]
  %s5 = inlined_call_operand.vmem [shape: f32[128,64], index: 5, kind: input, shape index: {}]
  %s6 = inlined_call_operand.vmem [shape: f32[1,64], index: 6, kind: input, shape index: {}]
  %s7 = inlined_call_operand.vmem [shape: f32[256,64], index: 7, kind: output, shape index: {}]
  %s8 = sld [smem:[#allocation0]]
  $region61: #{tpu_custom_call.1} parent=0
    _
  %s10 = ssub.s32 1, %s8
  %s11 = scalar_select 0, %s10, %s8
  loop: start=0, step=1, limit=4
  $region2: #{tpu_custom_call.1} parent=0 // loop_pre_header
    _
  $region3: #{tpu_custom_call.1} parent=0 // loop_header
    %s13 = sphi 0, %s17
    %p14 = scmp.ge.s32.totalorder %s13, 4
    %s23 = sphi 0, %s25
    %s26 = sphi 0, %s23
    %s27 = sphi 0, %s26
    %s43 = sphi 0, %s27
    %s47 = sphi 0, %s47
    %s49 = sphi 0, %s47
    %s50 = sphi 0, %s49
    %s64 = sphi 0, %s50
    %s68 = sphi 0, %s68
    %s70 = sphi 0, %s68
    %s71 = sphi 0, %s70
    %s85 = sphi 0, %s71
    %s89 = sphi 0, %s89
    %s91 = sphi 0, %s89
    %s92 = sphi 0, %s91
    %s106 = sphi 0, %s92
    %s110 = sphi 0, %s110
    %s112 = sphi 0, %s110
    %s113 = sphi 0, %s112
    %s127 = sphi 0, %s113
    %s131 = sphi 0, %s131
    %s133 = sphi 0, %s131
    %s134 = sphi 0, %s133
    %s148 = sphi 0, %s134
    %s152 = sphi 0, %s152
    %s154 = sphi 0, %s152
    %s155 = sphi 0, %s154
    %s169 = sphi 0, %s155
    %s175 = sphi 0, %s177
    %s178 = sphi 0, %s175
    %s179 = sphi 0, %s178
    %s195 = sphi 0, %s179
  $region4: #{tpu_custom_call.1} parent=0 // loop_header_branch
    %16 = sbr.rel (%p14) target = $region8
  $region5: #{tpu_custom_call.1} parent=0 // loop_body
    %s18 = ssub.s32 %s13, 1
    %s19 = ssub.s32 %s13, 2
    %s20 = sadd.s32 %s13, 1
    %s21 = ssub.s32 %s13, %s20
    %p22 = scmp.eq.s32.totalorder %s21, 0
    %s24 = sadd.s32 %s23, 1
    %s25 = scalar_select %p22, %s23, %s24
    %p28 = pneg %p22
    %p29 = scmp.eq.s32.totalorder %s13, 1
    %p30 = por %p28, %p29
    %p31 = scmp.ne.s32.totalorder %s23, %s26
    %p32 = scmp.eq.s32.totalorder %s13, 0
    %p33 = por %p31, %p32
    %p34 = scmp.ne.s32.totalorder %s23, %s26
    %p35 = scmp.eq.s32.totalorder %s18, 1
    %p36 = por %p34, %p35
    %p37 = scmp.ne.s32.totalorder %s26, %s27
    %p38 = scmp.eq.s32.totalorder %s18, 0
    %p39 = por %p37, %p38
    %p40 = scmp.ne.s32.totalorder %s26, %s27
    %p41 = scmp.eq.s32.totalorder %s19, 1
    %p42 = por %p40, %p41
    %p44 = scmp.ne.s32.totalorder %s27, %s43
    %p45 = scmp.eq.s32.totalorder %s19, 0
    %p46 = por %p44, %p45
    %s48 = sadd.s32 %s47, 1
    %p51 = scmp.eq.s32.totalorder %s13, 1
    %p52 = scmp.ne.s32.totalorder %s47, %s49
    %p53 = scmp.eq.s32.totalorder %s13, 0
    %p54 = por %p52, %p53
    %p55 = scmp.ne.s32.totalorder %s47, %s49
    %p56 = scmp.eq.s32.totalorder %s18, 1
    %p57 = por %p55, %p56
    %p58 = scmp.ne.s32.totalorder %s49, %s50
    %p59 = scmp.eq.s32.totalorder %s18, 0
    %p60 = por %p58, %p59
    %p61 = scmp.ne.s32.totalorder %s49, %s50
    %p62 = scmp.eq.s32.totalorder %s19, 1
    %p63 = por %p61, %p62
    %p65 = scmp.ne.s32.totalorder %s50, %s64
    %p66 = scmp.eq.s32.totalorder %s19, 0
    %p67 = por %p65, %p66
    %s69 = sadd.s32 %s68, 1
    %p72 = scmp.eq.s32.totalorder %s13, 1
    %p73 = scmp.ne.s32.totalorder %s68, %s70
    %p74 = scmp.eq.s32.totalorder %s13, 0
    %p75 = por %p73, %p74
    %p76 = scmp.ne.s32.totalorder %s68, %s70
    %p77 = scmp.eq.s32.totalorder %s18, 1
    %p78 = por %p76, %p77
    %p79 = scmp.ne.s32.totalorder %s70, %s71
    %p80 = scmp.eq.s32.totalorder %s18, 0
    %p81 = por %p79, %p80
    %p82 = scmp.ne.s32.totalorder %s70, %s71
    %p83 = scmp.eq.s32.totalorder %s19, 1
    %p84 = por %p82, %p83
    %p86 = scmp.ne.s32.totalorder %s71, %s85
    %p87 = scmp.eq.s32.totalorder %s19, 0
    %p88 = por %p86, %p87
    %s90 = sadd.s32 %s89, 1
    %p93 = scmp.eq.s32.totalorder %s13, 1
    %p94 = scmp.ne.s32.totalorder %s89, %s91
    %p95 = scmp.eq.s32.totalorder %s13, 0
    %p96 = por %p94, %p95
    %p97 = scmp.ne.s32.totalorder %s89, %s91
    %p98 = scmp.eq.s32.totalorder %s18, 1
    %p99 = por %p97, %p98
    %p100 = scmp.ne.s32.totalorder %s91, %s92
    %p101 = scmp.eq.s32.totalorder %s18, 0
    %p102 = por %p100, %p101
    %p103 = scmp.ne.s32.totalorder %s91, %s92
    %p104 = scmp.eq.s32.totalorder %s19, 1
    %p105 = por %p103, %p104
    %p107 = scmp.ne.s32.totalorder %s92, %s106
    %p108 = scmp.eq.s32.totalorder %s19, 0
    %p109 = por %p107, %p108
    %s111 = sadd.s32 %s110, 1
    %p114 = scmp.eq.s32.totalorder %s13, 1
    %p115 = scmp.ne.s32.totalorder %s110, %s112
    %p116 = scmp.eq.s32.totalorder %s13, 0
    %p117 = por %p115, %p116
    %p118 = scmp.ne.s32.totalorder %s110, %s112
    %p119 = scmp.eq.s32.totalorder %s18, 1
    %p120 = por %p118, %p119
    %p121 = scmp.ne.s32.totalorder %s112, %s113
    %p122 = scmp.eq.s32.totalorder %s18, 0
    %p123 = por %p121, %p122
    %p124 = scmp.ne.s32.totalorder %s112, %s113
    %p125 = scmp.eq.s32.totalorder %s19, 1
    %p126 = por %p124, %p125
    %p128 = scmp.ne.s32.totalorder %s113, %s127
    %p129 = scmp.eq.s32.totalorder %s19, 0
    %p130 = por %p128, %p129
    %s132 = sadd.s32 %s131, 1
    %p135 = scmp.eq.s32.totalorder %s13, 1
    %p136 = scmp.ne.s32.totalorder %s131, %s133
    %p137 = scmp.eq.s32.totalorder %s13, 0
    %p138 = por %p136, %p137
    %p139 = scmp.ne.s32.totalorder %s131, %s133
    %p140 = scmp.eq.s32.totalorder %s18, 1
    %p141 = por %p139, %p140
    %p142 = scmp.ne.s32.totalorder %s133, %s134
    %p143 = scmp.eq.s32.totalorder %s18, 0
    %p144 = por %p142, %p143
    %p145 = scmp.ne.s32.totalorder %s133, %s134
    %p146 = scmp.eq.s32.totalorder %s19, 1
    %p147 = por %p145, %p146
    %p149 = scmp.ne.s32.totalorder %s134, %s148
    %p150 = scmp.eq.s32.totalorder %s19, 0
    %p151 = por %p149, %p150
    %s153 = sadd.s32 %s152, 1
    %p156 = scmp.eq.s32.totalorder %s13, 1
    %p157 = scmp.ne.s32.totalorder %s152, %s154
    %p158 = scmp.eq.s32.totalorder %s13, 0
    %p159 = por %p157, %p158
    %p160 = scmp.ne.s32.totalorder %s152, %s154
    %p161 = scmp.eq.s32.totalorder %s18, 1
    %p162 = por %p160, %p161
    %p163 = scmp.ne.s32.totalorder %s154, %s155
    %p164 = scmp.eq.s32.totalorder %s18, 0
    %p165 = por %p163, %p164
    %p166 = scmp.ne.s32.totalorder %s154, %s155
    %p167 = scmp.eq.s32.totalorder %s19, 1
    %p168 = por %p166, %p167
    %p170 = scmp.ne.s32.totalorder %s155, %s169
    %p171 = scmp.eq.s32.totalorder %s19, 0
    %p172 = por %p170, %p171
    %s173 = ssub.s32 %s13, %s20
    %p174 = scmp.eq.s32.totalorder %s173, 0
    %s176 = sadd.s32 %s175, 1
    %s177 = scalar_select %p174, %s175, %s176
    %p180 = pneg %p174
    %p181 = scmp.eq.s32.totalorder %s13, 1
    %p182 = por %p180, %p181
    %p183 = scmp.ne.s32.totalorder %s175, %s178
    %p184 = scmp.eq.s32.totalorder %s13, 0
    %p185 = por %p183, %p184
    %p186 = scmp.ne.s32.totalorder %s175, %s178
    %p187 = scmp.eq.s32.totalorder %s18, 1
    %p188 = por %p186, %p187
    %p189 = scmp.ne.s32.totalorder %s178, %s179
    %p190 = scmp.eq.s32.totalorder %s18, 0
    %p191 = por %p189, %p190
    %p192 = scmp.ne.s32.totalorder %s178, %s179
    %p193 = scmp.eq.s32.totalorder %s19, 1
    %p194 = por %p192, %p193
    %p196 = scmp.ne.s32.totalorder %s179, %s195
    %p197 = scmp.eq.s32.totalorder %s19, 0
    %p198 = por %p196, %p197
    %p199 = scmp.le.s32.totalorder 1, %s13
    %p200 = scmp.lt.s32.totalorder %s13, 3
    %p201 = pnand %p199, %p200
    %p202 = pneg %p201
    // Predicated region
    $region9: #{tpu_custom_call.1} parent=5 // pred_check
      _
    $region10: #{tpu_custom_call.1} parent=5 // pred_check_branch
      %204 = sbr.rel (%p201) target = $region12
    $region11: #{tpu_custom_call.1} parent=5 // pred_region
      %s205 = ssub.s32 %s13, 1
      // Predicated region
      $region13: #{tpu_custom_call.1} parent=11 // pred_check
        %p206 = pneg %p60
      $region14: #{tpu_custom_call.1} parent=11 // pred_check_branch
        %208 = sbr.rel (%p206) target = $region16
      $region15: #{tpu_custom_call.1} parent=11 // pred_region
        _
      $region16: #{tpu_custom_call.1} parent=11 // pred_fallthru
        _
      // Predicated region
      $region17: #{tpu_custom_call.1} parent=11 // pred_check
        %p209 = pneg %p81
      $region18: #{tpu_custom_call.1} parent=11 // pred_check_branch
        %211 = sbr.rel (%p209) target = $region20
      $region19: #{tpu_custom_call.1} parent=11 // pred_region
        _
      $region20: #{tpu_custom_call.1} parent=11 // pred_fallthru
        _
      // Predicated region
      $region21: #{tpu_custom_call.1} parent=11 // pred_check
        %p212 = pneg %p102
      $region22: #{tpu_custom_call.1} parent=11 // pred_check_branch
        %214 = sbr.rel (%p212) target = $region24
      $region23: #{tpu_custom_call.1} parent=11 // pred_region
        _
      $region24: #{tpu_custom_call.1} parent=11 // pred_fallthru
        _
      // Predicated region
      $region25: #{tpu_custom_call.1} parent=11 // pred_check
        %p215 = pneg %p123
      $region26: #{tpu_custom_call.1} parent=11 // pred_check_branch
        %217 = sbr.rel (%p215) target = $region28
      $region27: #{tpu_custom_call.1} parent=11 // pred_region
        _
      $region28: #{tpu_custom_call.1} parent=11 // pred_fallthru
        _
      // Predicated region
      $region29: #{tpu_custom_call.1} parent=11 // pred_check
        %p218 = pneg %p144
      $region30: #{tpu_custom_call.1} parent=11 // pred_check_branch
        %220 = sbr.rel (%p218) target = $region32
      $region31: #{tpu_custom_call.1} parent=11 // pred_region
        _
      $region32: #{tpu_custom_call.1} parent=11 // pred_fallthru
        _
      // Predicated region
      $region33: #{tpu_custom_call.1} parent=11 // pred_check
        %p221 = pneg %p165
      $region34: #{tpu_custom_call.1} parent=11 // pred_check_branch
        %223 = sbr.rel (%p221) target = $region36
      $region35: #{tpu_custom_call.1} parent=11 // pred_region
        _
      $region36: #{tpu_custom_call.1} parent=11 // pred_fallthru
        _
    $region12: #{tpu_custom_call.1} parent=5 // pred_fallthru
      _
    %p224 = scmp.lt.s32.totalorder %s13, 2
    // Predicated region
    $region37: #{tpu_custom_call.1} parent=5 // pred_check
      %p225 = pneg %p224
    $region38: #{tpu_custom_call.1} parent=5 // pred_check_branch
      %227 = sbr.rel (%p225) target = $region40
    $region39: #{tpu_custom_call.1} parent=5 // pred_region
      // Predicated region
      $region41: #{tpu_custom_call.1} parent=39 // pred_check
        %p228 = pneg %p33
      $region42: #{tpu_custom_call.1} parent=39 // pred_check_branch
        %230 = sbr.rel (%p228) target = $region44
      $region43: #{tpu_custom_call.1} parent=39 // pred_region
        %s231 = smul.u32 16, %s13
        %p232 = scmp.lt.s32.totalorder %s231, 31
        %s233 = scalar_select %p232, %s231, 31
        %s234 = smul.addr %s233, 8
        %s235 = scalar_lea.vmem %s0, %s234
        %s236 = smul.u32 16, %s13
      $region44: #{tpu_custom_call.1} parent=39 // pred_fallthru
        _
    $region40: #{tpu_custom_call.1} parent=5 // pred_fallthru
      _
    %p237 = scmp.le.s32.totalorder 1, %s13
    %p238 = scmp.lt.s32.totalorder %s13, 3
    %p239 = pnand %p237, %p238
    %p240 = pneg %p239
    // Predicated region
    $region45: #{tpu_custom_call.1} parent=5 // pred_check
      _
    $region46: #{tpu_custom_call.1} parent=5 // pred_check_branch
      %242 = sbr.rel (%p239) target = $region48
    $region47: #{tpu_custom_call.1} parent=5 // pred_region
      %s243 = ssub.s32 %s13, 1
      %s244 = smul.u32 16, %s18
      %p245 = scmp.lt.s32.totalorder %s244, 31
      %s246 = scalar_select %p245, %s244, 31
      %s247 = smul.addr %s246, 8
      %s248 = scalar_lea.vmem %s0, %s247
      %p249 = pneg %p39
      %p250 = pneg %p36
      %p251 = pneg %p60
      %p252 = pneg %p57
      %p253 = pneg %p81
      %p254 = pneg %p78
      %p255 = pneg %p102
      %p256 = pneg %p99
      %p257 = pneg %p123
      %p258 = pneg %p120
      %p259 = pneg %p144
      %p260 = pneg %p141
      %p261 = pneg %p165
      %p262 = pneg %p162
      %p263 = pneg %p191
      %p264 = pneg %p188
      %s265 = smul.u32 16, %s18
      %p266 = scmp.lt.s32.totalorder %s265, 31
      %s267 = scalar_select %p266, %s265, 31
      %s268 = smul.addr %s267, 8
      %s269 = scalar_lea.vmem %s7, %s268
      %s270 = smul.u32 16, %s18
      %p271 = scmp.lt.s32.totalorder %s270, 31
      %s272 = scalar_select %p271, %s270, 31
      %s273 = smul.addr %s272, 8
      %s274 = scalar_lea.vmem %s0, %s273
      %s275 = smul.u32 16, %s18
      %s276 = smul.u32 16, %s18
      %p277 = scmp.lt.s32.totalorder %s276, 31
      %s278 = scalar_select %p277, %s276, 31
      %s279 = smul.addr %s278, 8
      %s280 = scalar_lea.vmem %s7, %s279
      %s281 = smul.u32 16, %s18
      %v282 = vld [vmem:[%s274] sm:$0xff]
      %v283 = vld [vmem:[%s274 + $0x8] sm:$0xff]
      %v284 = vld [vmem:[%s274 + $0x10] sm:$0xff]
      %v285 = vld [vmem:[%s274 + $0x18] sm:$0xff]
      %v286 = vld [vmem:[%s274 + $0x20] sm:$0xff]
      %v287 = vld [vmem:[%s274 + $0x28] sm:$0xff]
      %v288 = vld [vmem:[%s274 + $0x30] sm:$0xff]
      %v289 = vld [vmem:[%s274 + $0x38] sm:$0xff]
      %v290 = vld [vmem:[%s274 + $0x40] sm:$0xff]
      %v291 = vld [vmem:[%s274 + $0x48] sm:$0xff]
      %v292 = vld [vmem:[%s274 + $0x50] sm:$0xff]
      %v293 = vld [vmem:[%s274 + $0x58] sm:$0xff]
      %v294 = vld [vmem:[%s274 + $0x60] sm:$0xff]
      %v295 = vld [vmem:[%s274 + $0x68] sm:$0xff]
      %v296 = vld [vmem:[%s274 + $0x70] sm:$0xff]
      %v297 = vld [vmem:[%s274 + $0x78] sm:$0xff]
      %v298 = vld [vmem:[%s1] sm:$0xff]
      %v299 = vld [vmem:[%s1 + $0x8] sm:$0xff]
      %v300 = vld [vmem:[%s1 + $0x10] sm:$0xff]
      %v301 = vld [vmem:[%s1 + $0x18] sm:$0xff]
      %v302 = vld [vmem:[%s2] sm:$0x1]
      %v304 = vlaneseq
      %v305 = vshrl.u32 %v304, 7
      %v306 = vsub.s32 0, %v305
      %v307 = vrot.slane %v302, %v306
      %vm309 = vcmask 261120
      %v311 = vsel %vm309, %v282, 0
      %v314 = vsel %vm309, %v283, 0
      %v317 = vsel %vm309, %v284, 0
      %v320 = vsel %vm309, %v285, 0
      %v323 = vsel %vm309, %v286, 0
      %v326 = vsel %vm309, %v287, 0
      %v329 = vsel %vm309, %v288, 0
      %v332 = vsel %vm309, %v289, 0
      %v335 = vsel %vm309, %v290, 0
      %v338 = vsel %vm309, %v291, 0
      %v341 = vsel %vm309, %v292, 0
      %v344 = vsel %vm309, %v293, 0
      %v347 = vsel %vm309, %v294, 0
      %v350 = vsel %vm309, %v295, 0
      %v353 = vsel %vm309, %v296, 0
      %v356 = vsel %vm309, %v297, 0
      %358 = vmatprep.subr.mxu0 0.0
      %359 = vmatpush1.msra.mxu0 0.0
      %360 = vmatprep.subr.mxu0 0.0
      %361 = vmatpush1.msra.mxu0 0.0
      %362 = vmatprep.subr.mxu0 0.0
      %363 = vmatpush1.msra.mxu0 0.0
      %364 = vmatprep.subr.mxu0 0.0
      %365 = vmatpush1.msra.mxu0 0.0
      %366 = vmatprep.subr.mxu0 0.0
      %367 = vmatpush1.msra.mxu0 0.0
      %368 = vmatprep.subr.mxu0 0.0
      %369 = vmatpush1.msra.mxu0 0.0
      %370 = vmatprep.subr.mxu0 0.0
      %371 = vmatpush1.msra.mxu0 0.0
      %372 = vmatprep.subr.mxu0 0.0
      %373 = vmatpush1.msra.mxu0 0.0
      %374 = vmatprep.subr.mxu0 0.0
      %375 = vmatpush1.msra.mxu0 0.0
      %376 = vmatprep.subr.mxu0 0.0
      %377 = vmatpush1.msra.mxu0 0.0
      %378 = vmatprep.subr.mxu0 0.0
      %379 = vmatpush1.msra.mxu0 0.0
      %380 = vmatprep.subr.mxu0 0.0
      %381 = vmatpush1.msra.mxu0 0.0
      %382 = vmatprep.subr.mxu0 0.0
      %383 = vmatpush1.msra.mxu0 %v301
      %384 = vmatprep.subr.mxu0 0.0
      %385 = vmatpush1.msra.mxu0 %v300
      %386 = vmatprep.subr.mxu0 0.0
      %387 = vmatpush1.msra.mxu0 %v299
      %388 = vmatprep.subr.mxu0 0.0
      %389 = vmatpush1.msra.mxu0 %v298
      %390 = vmatprep.subr.mxu0 0.0
      %391 = vmatpush2.msra.mxu0 0.0
      %392 = vmatprep.subr.mxu0 0.0
      %393 = vmatpush2.msra.mxu0 0.0
      %394 = vmatprep.subr.mxu0 0.0
      %395 = vmatpush2.msra.mxu0 0.0
      %396 = vmatprep.subr.mxu0 0.0
      %397 = vmatpush2.msra.mxu0 0.0
      %398 = vmatprep.subr.mxu0 0.0
      %399 = vmatpush2.msra.mxu0 0.0
      %400 = vmatprep.subr.mxu0 0.0
      %401 = vmatpush2.msra.mxu0 0.0
      %402 = vmatprep.subr.mxu0 0.0
      %403 = vmatpush2.msra.mxu0 0.0
      %404 = vmatprep.subr.mxu0 0.0
      %405 = vmatpush2.msra.mxu0 0.0
      %406 = vmatprep.subr.mxu0 0.0
      %407 = vmatpush2.msra.mxu0 0.0
      %408 = vmatprep.subr.mxu0 0.0
      %409 = vmatpush2.msra.mxu0 0.0
      %410 = vmatprep.subr.mxu0 0.0
      %411 = vmatpush2.msra.mxu0 0.0
      %412 = vmatprep.subr.mxu0 0.0
      %413 = vmatpush2.msra.mxu0 0.0
      %414 = vmatprep.subr.mxu0 0.0
      %415 = vmatpush2.msra.mxu0 0.0
      %416 = vmatprep.subr.mxu0 0.0
      %417 = vmatpush2.msra.mxu0 0.0
      %418 = vmatprep.subr.mxu0 0.0
      %419 = vmatpush2.msra.mxu0 0.0
      %420 = vmatprep.subr.mxu0 0.0
      %421 = vmatpush2.msra.mxu0 0.0
      %422 = vmatprep.mubr.f32.mxu0 0.0
      %423 = vmatmul.mubr.f32.gmra.mxu0 %v311
      %v424 = vpop.f32.mrf.mxu0
      %v425 = vadd.f32 %v307, %v424
      %v426 = vpop.f32.mrf.mxu0
      %427 = vmatprep.mubr.f32.mxu0 0.0
      %428 = vmatmul.mubr.f32.gmra.mxu0 %v314
      %v429 = vpop.f32.mrf.mxu0
      %v430 = vadd.f32 %v307, %v429
      %v431 = vpop.f32.mrf.mxu0
      %432 = vmatprep.mubr.f32.mxu0 0.0
      %433 = vmatmul.mubr.f32.gmra.mxu0 %v317
      %v434 = vpop.f32.mrf.mxu0
      %v435 = vadd.f32 %v307, %v434
      %v436 = vpop.f32.mrf.mxu0
      %437 = vmatprep.mubr.f32.mxu0 0.0
      %438 = vmatmul.mubr.f32.gmra.mxu0 %v320
      %v439 = vpop.f32.mrf.mxu0
      %v440 = vadd.f32 %v307, %v439
      %v441 = vpop.f32.mrf.mxu0
      %442 = vmatprep.mubr.f32.mxu0 0.0
      %443 = vmatmul.mubr.f32.gmra.mxu0 %v323
      %v444 = vpop.f32.mrf.mxu0
      %v445 = vadd.f32 %v307, %v444
      %v446 = vpop.f32.mrf.mxu0
      %447 = vmatprep.mubr.f32.mxu0 0.0
      %448 = vmatmul.mubr.f32.gmra.mxu0 %v326
      %v449 = vpop.f32.mrf.mxu0
      %v450 = vadd.f32 %v307, %v449
      %v451 = vpop.f32.mrf.mxu0
      %452 = vmatprep.mubr.f32.mxu0 0.0
      %453 = vmatmul.mubr.f32.gmra.mxu0 %v329
      %v454 = vpop.f32.mrf.mxu0
      %v455 = vadd.f32 %v307, %v454
      %v456 = vpop.f32.mrf.mxu0
      %457 = vmatprep.mubr.f32.mxu0 0.0
      %458 = vmatmul.mubr.f32.gmra.mxu0 %v332
      %v459 = vpop.f32.mrf.mxu0
      %v460 = vadd.f32 %v307, %v459
      %v461 = vpop.f32.mrf.mxu0
      %462 = vmatprep.mubr.f32.mxu0 0.0
      %463 = vmatmul.mubr.f32.gmra.mxu0 %v335
      %v464 = vpop.f32.mrf.mxu0
      %v465 = vadd.f32 %v307, %v464
      %v466 = vpop.f32.mrf.mxu0
      %467 = vmatprep.mubr.f32.mxu0 0.0
      %468 = vmatmul.mubr.f32.gmra.mxu0 %v338
      %v469 = vpop.f32.mrf.mxu0
      %v470 = vadd.f32 %v307, %v469
      %v471 = vpop.f32.mrf.mxu0
      %472 = vmatprep.mubr.f32.mxu0 0.0
      %473 = vmatmul.mubr.f32.gmra.mxu0 %v341
      %v474 = vpop.f32.mrf.mxu0
      %v475 = vadd.f32 %v307, %v474
      %v476 = vpop.f32.mrf.mxu0
      %477 = vmatprep.mubr.f32.mxu0 0.0
      %478 = vmatmul.mubr.f32.gmra.mxu0 %v344
      %v479 = vpop.f32.mrf.mxu0
      %v480 = vadd.f32 %v307, %v479
      %v481 = vpop.f32.mrf.mxu0
      %482 = vmatprep.mubr.f32.mxu0 0.0
      %483 = vmatmul.mubr.f32.gmra.mxu0 %v347
      %v484 = vpop.f32.mrf.mxu0
      %v485 = vadd.f32 %v307, %v484
      %v486 = vpop.f32.mrf.mxu0
      %487 = vmatprep.mubr.f32.mxu0 0.0
      %488 = vmatmul.mubr.f32.gmra.mxu0 %v350
      %v489 = vpop.f32.mrf.mxu0
      %v490 = vadd.f32 %v307, %v489
      %v491 = vpop.f32.mrf.mxu0
      %492 = vmatprep.mubr.f32.mxu0 0.0
      %493 = vmatmul.mubr.f32.gmra.mxu0 %v353
      %v494 = vpop.f32.mrf.mxu0
      %v495 = vadd.f32 %v307, %v494
      %v496 = vpop.f32.mrf.mxu0
      %497 = vmatprep.mubr.f32.mxu0 0.0
      %498 = vmatmul.mubr.f32.gmra.mxu0 %v356
      %v499 = vpop.f32.mrf.mxu0
      %v500 = vadd.f32 %v307, %v499
      %v501 = vpop.f32.mrf.mxu0
      %502 = vdwg.mxu0
      %v503 = vmax.f32 %v425, 0.0
      %v504 = vmax.f32 %v430, 0.0
      %v505 = vmax.f32 %v435, 0.0
      %v506 = vmax.f32 %v440, 0.0
      %v507 = vmax.f32 %v445, 0.0
      %v508 = vmax.f32 %v450, 0.0
      %v509 = vmax.f32 %v455, 0.0
      %v510 = vmax.f32 %v460, 0.0
      %v511 = vmax.f32 %v465, 0.0
      %v512 = vmax.f32 %v470, 0.0
      %v513 = vmax.f32 %v475, 0.0
      %v514 = vmax.f32 %v480, 0.0
      %v515 = vmax.f32 %v485, 0.0
      %v516 = vmax.f32 %v490, 0.0
      %v517 = vmax.f32 %v495, 0.0
      %v518 = vmax.f32 %v500, 0.0
      %v519 = vmin.f32 %v503, 6.0
      %v520 = vmin.f32 %v504, 6.0
      %v521 = vmin.f32 %v505, 6.0
      %v522 = vmin.f32 %v506, 6.0
      %v523 = vmin.f32 %v507, 6.0
      %v524 = vmin.f32 %v508, 6.0
      %v525 = vmin.f32 %v509, 6.0
      %v526 = vmin.f32 %v510, 6.0
      %v527 = vmin.f32 %v511, 6.0
      %v528 = vmin.f32 %v512, 6.0
      %v529 = vmin.f32 %v513, 6.0
      %v530 = vmin.f32 %v514, 6.0
      %v531 = vmin.f32 %v515, 6.0
      %v532 = vmin.f32 %v516, 6.0
      %v533 = vmin.f32 %v517, 6.0
      %v534 = vmin.f32 %v518, 6.0
      %v535 = vld [vmem:[%s3] sm:$0xff]
      %v536 = vld [vmem:[%s3 + $0x8] sm:$0xff]
      %v537 = vld [vmem:[%s3 + $0x10] sm:$0xff]
      %v538 = vld [vmem:[%s3 + $0x18] sm:$0xff]
      %v539 = vld [vmem:[%s3 + $0x20] sm:$0xff]
      %v540 = vld [vmem:[%s3 + $0x28] sm:$0xff]
      %v541 = vld [vmem:[%s3 + $0x30] sm:$0xff]
      %v542 = vld [vmem:[%s3 + $0x38] sm:$0xff]
      %v543 = vld [vmem:[%s3 + $0x40] sm:$0xff]
      %v544 = vld [vmem:[%s3 + $0x48] sm:$0xff]
      %v545 = vld [vmem:[%s3 + $0x50] sm:$0xff]
      %v546 = vld [vmem:[%s3 + $0x58] sm:$0xff]
      %v547 = vld [vmem:[%s3 + $0x60] sm:$0xff]
      %v548 = vld [vmem:[%s3 + $0x68] sm:$0xff]
      %v549 = vld [vmem:[%s3 + $0x70] sm:$0xff]
      %v550 = vld [vmem:[%s3 + $0x78] sm:$0xff]
      %v551 = vld [vmem:[%s4] sm:$0x1]
      %v553 = vlaneseq
      %v554 = vshrl.u32 %v553, 7
      %v555 = vsub.s32 0, %v554
      %v556 = vrot.slane %v551, %v555
      %558 = vmatprep.subr.mxu0 0.0
      %559 = vmatpush1.msra.mxu0 %v550
      %560 = vmatprep.subr.mxu0 0.0
      %561 = vmatpush1.msra.mxu0 %v549
      %562 = vmatprep.subr.mxu0 0.0
      %563 = vmatpush1.msra.mxu0 %v548
      %564 = vmatprep.subr.mxu0 0.0
      %565 = vmatpush1.msra.mxu0 %v547
      %566 = vmatprep.subr.mxu0 0.0
      %567 = vmatpush1.msra.mxu0 %v546
      %568 = vmatprep.subr.mxu0 0.0
      %569 = vmatpush1.msra.mxu0 %v545
      %570 = vmatprep.subr.mxu0 0.0
      %571 = vmatpush1.msra.mxu0 %v544
      %572 = vmatprep.subr.mxu0 0.0
      %573 = vmatpush1.msra.mxu0 %v543
      %574 = vmatprep.subr.mxu0 0.0
      %575 = vmatpush1.msra.mxu0 %v542
      %576 = vmatprep.subr.mxu0 0.0
      %577 = vmatpush1.msra.mxu0 %v541
      %578 = vmatprep.subr.mxu0 0.0
      %579 = vmatpush1.msra.mxu0 %v540
      %580 = vmatprep.subr.mxu0 0.0
      %581 = vmatpush1.msra.mxu0 %v539
      %582 = vmatprep.subr.mxu0 0.0
      %583 = vmatpush1.msra.mxu0 %v538
      %584 = vmatprep.subr.mxu0 0.0
      %585 = vmatpush1.msra.mxu0 %v537
      %586 = vmatprep.subr.mxu0 0.0
      %587 = vmatpush1.msra.mxu0 %v536
      %588 = vmatprep.subr.mxu0 0.0
      %589 = vmatpush1.msra.mxu0 %v535
      %590 = vmatprep.subr.mxu0 0.0
      %591 = vmatpush2.msra.mxu0 0.0
      %592 = vmatprep.subr.mxu0 0.0
      %593 = vmatpush2.msra.mxu0 0.0
      %594 = vmatprep.subr.mxu0 0.0
      %595 = vmatpush2.msra.mxu0 0.0
      %596 = vmatprep.subr.mxu0 0.0
      %597 = vmatpush2.msra.mxu0 0.0
      %598 = vmatprep.subr.mxu0 0.0
      %599 = vmatpush2.msra.mxu0 0.0
      %600 = vmatprep.subr.mxu0 0.0
      %601 = vmatpush2.msra.mxu0 0.0
      %602 = vmatprep.subr.mxu0 0.0
      %603 = vmatpush2.msra.mxu0 0.0
      %604 = vmatprep.subr.mxu0 0.0
      %605 = vmatpush2.msra.mxu0 0.0
      %606 = vmatprep.subr.mxu0 0.0
      %607 = vmatpush2.msra.mxu0 0.0
      %608 = vmatprep.subr.mxu0 0.0
      %609 = vmatpush2.msra.mxu0 0.0
      %610 = vmatprep.subr.mxu0 0.0
      %611 = vmatpush2.msra.mxu0 0.0
      %612 = vmatprep.subr.mxu0 0.0
      %613 = vmatpush2.msra.mxu0 0.0
      %614 = vmatprep.subr.mxu0 0.0
      %615 = vmatpush2.msra.mxu0 0.0
      %616 = vmatprep.subr.mxu0 0.0
      %617 = vmatpush2.msra.mxu0 0.0
      %618 = vmatprep.subr.mxu0 0.0
      %619 = vmatpush2.msra.mxu0 0.0
      %620 = vmatprep.subr.mxu0 0.0
      %621 = vmatpush2.msra.mxu0 0.0
      %622 = vmatprep.mubr.f32.mxu0 0.0
      %623 = vmatmul.mubr.f32.gmra.mxu0 %v519
      %v624 = vpop.f32.mrf.mxu0
      %v625 = vadd.f32 %v556, %v624
      %v626 = vpop.f32.mrf.mxu0
      %627 = vmatprep.mubr.f32.mxu0 0.0
      %628 = vmatmul.mubr.f32.gmra.mxu0 %v520
      %v629 = vpop.f32.mrf.mxu0
      %v630 = vadd.f32 %v556, %v629
      %v631 = vpop.f32.mrf.mxu0
      %632 = vmatprep.mubr.f32.mxu0 0.0
      %633 = vmatmul.mubr.f32.gmra.mxu0 %v521
      %v634 = vpop.f32.mrf.mxu0
      %v635 = vadd.f32 %v556, %v634
      %v636 = vpop.f32.mrf.mxu0
      %637 = vmatprep.mubr.f32.mxu0 0.0
      %638 = vmatmul.mubr.f32.gmra.mxu0 %v522
      %v639 = vpop.f32.mrf.mxu0
      %v640 = vadd.f32 %v556, %v639
      %v641 = vpop.f32.mrf.mxu0
      %642 = vmatprep.mubr.f32.mxu0 0.0
      %643 = vmatmul.mubr.f32.gmra.mxu0 %v523
      %v644 = vpop.f32.mrf.mxu0
      %v645 = vadd.f32 %v556, %v644
      %v646 = vpop.f32.mrf.mxu0
      %647 = vmatprep.mubr.f32.mxu0 0.0
      %648 = vmatmul.mubr.f32.gmra.mxu0 %v524
      %v649 = vpop.f32.mrf.mxu0
      %v650 = vadd.f32 %v556, %v649
      %v651 = vpop.f32.mrf.mxu0
      %652 = vmatprep.mubr.f32.mxu0 0.0
      %653 = vmatmul.mubr.f32.gmra.mxu0 %v525
      %v654 = vpop.f32.mrf.mxu0
      %v655 = vadd.f32 %v556, %v654
      %v656 = vpop.f32.mrf.mxu0
      %657 = vmatprep.mubr.f32.mxu0 0.0
      %658 = vmatmul.mubr.f32.gmra.mxu0 %v526
      %v659 = vpop.f32.mrf.mxu0
      %v660 = vadd.f32 %v556, %v659
      %v661 = vpop.f32.mrf.mxu0
      %662 = vmatprep.mubr.f32.mxu0 0.0
      %663 = vmatmul.mubr.f32.gmra.mxu0 %v527
      %v664 = vpop.f32.mrf.mxu0
      %v665 = vadd.f32 %v556, %v664
      %v666 = vpop.f32.mrf.mxu0
      %667 = vmatprep.mubr.f32.mxu0 0.0
      %668 = vmatmul.mubr.f32.gmra.mxu0 %v528
      %v669 = vpop.f32.mrf.mxu0
      %v670 = vadd.f32 %v556, %v669
      %v671 = vpop.f32.mrf.mxu0
      %672 = vmatprep.mubr.f32.mxu0 0.0
      %673 = vmatmul.mubr.f32.gmra.mxu0 %v529
      %v674 = vpop.f32.mrf.mxu0
      %v675 = vadd.f32 %v556, %v674
      %v676 = vpop.f32.mrf.mxu0
      %677 = vmatprep.mubr.f32.mxu0 0.0
      %678 = vmatmul.mubr.f32.gmra.mxu0 %v530
      %v679 = vpop.f32.mrf.mxu0
      %v680 = vadd.f32 %v556, %v679
      %v681 = vpop.f32.mrf.mxu0
      %682 = vmatprep.mubr.f32.mxu0 0.0
      %683 = vmatmul.mubr.f32.gmra.mxu0 %v531
      %v684 = vpop.f32.mrf.mxu0
      %v685 = vadd.f32 %v556, %v684
      %v686 = vpop.f32.mrf.mxu0
      %687 = vmatprep.mubr.f32.mxu0 0.0
      %688 = vmatmul.mubr.f32.gmra.mxu0 %v532
      %v689 = vpop.f32.mrf.mxu0
      %v690 = vadd.f32 %v556, %v689
      %v691 = vpop.f32.mrf.mxu0
      %692 = vmatprep.mubr.f32.mxu0 0.0
      %693 = vmatmul.mubr.f32.gmra.mxu0 %v533
      %v694 = vpop.f32.mrf.mxu0
      %v695 = vadd.f32 %v556, %v694
      %v696 = vpop.f32.mrf.mxu0
      %697 = vmatprep.mubr.f32.mxu0 0.0
      %698 = vmatmul.mubr.f32.gmra.mxu0 %v534
      %v699 = vpop.f32.mrf.mxu0
      %v700 = vadd.f32 %v556, %v699
      %v701 = vpop.f32.mrf.mxu0
      %702 = vdwg.mxu0
      %v703 = vmax.f32 %v625, 0.0
      %v704 = vmax.f32 %v630, 0.0
      %v705 = vmax.f32 %v635, 0.0
      %v706 = vmax.f32 %v640, 0.0
      %v707 = vmax.f32 %v645, 0.0
      %v708 = vmax.f32 %v650, 0.0
      %v709 = vmax.f32 %v655, 0.0
      %v710 = vmax.f32 %v660, 0.0
      %v711 = vmax.f32 %v665, 0.0
      %v712 = vmax.f32 %v670, 0.0
      %v713 = vmax.f32 %v675, 0.0
      %v714 = vmax.f32 %v680, 0.0
      %v715 = vmax.f32 %v685, 0.0
      %v716 = vmax.f32 %v690, 0.0
      %v717 = vmax.f32 %v695, 0.0
      %v718 = vmax.f32 %v700, 0.0
      %v719 = vmin.f32 %v703, 6.0
      %v720 = vmin.f32 %v704, 6.0
      %v721 = vmin.f32 %v705, 6.0
      %v722 = vmin.f32 %v706, 6.0
      %v723 = vmin.f32 %v707, 6.0
      %v724 = vmin.f32 %v708, 6.0
      %v725 = vmin.f32 %v709, 6.0
      %v726 = vmin.f32 %v710, 6.0
      %v727 = vmin.f32 %v711, 6.0
      %v728 = vmin.f32 %v712, 6.0
      %v729 = vmin.f32 %v713, 6.0
      %v730 = vmin.f32 %v714, 6.0
      %v731 = vmin.f32 %v715, 6.0
      %v732 = vmin.f32 %v716, 6.0
      %v733 = vmin.f32 %v717, 6.0
      %v734 = vmin.f32 %v718, 6.0
      %v735 = vld [vmem:[%s5] sm:$0xff]
      %v736 = vld [vmem:[%s5 + $0x8] sm:$0xff]
      %v737 = vld [vmem:[%s5 + $0x10] sm:$0xff]
      %v738 = vld [vmem:[%s5 + $0x18] sm:$0xff]
      %v739 = vld [vmem:[%s5 + $0x20] sm:$0xff]
      %v740 = vld [vmem:[%s5 + $0x28] sm:$0xff]
      %v741 = vld [vmem:[%s5 + $0x30] sm:$0xff]
      %v742 = vld [vmem:[%s5 + $0x38] sm:$0xff]
      %v743 = vld [vmem:[%s5 + $0x40] sm:$0xff]
      %v744 = vld [vmem:[%s5 + $0x48] sm:$0xff]
      %v745 = vld [vmem:[%s5 + $0x50] sm:$0xff]
      %v746 = vld [vmem:[%s5 + $0x58] sm:$0xff]
      %v747 = vld [vmem:[%s5 + $0x60] sm:$0xff]
      %v748 = vld [vmem:[%s5 + $0x68] sm:$0xff]
      %v749 = vld [vmem:[%s5 + $0x70] sm:$0xff]
      %v750 = vld [vmem:[%s5 + $0x78] sm:$0xff]
      %v751 = vld [vmem:[%s6] sm:$0x1]
      %v753 = vlaneseq
      %v754 = vshrl.u32 %v753, 7
      %v755 = vsub.s32 0, %v754
      %v756 = vrot.slane %v751, %v755
      %758 = vmatprep.subr.mxu0 0.0
      %759 = vmatpush1.msra.mxu0 %v750
      %760 = vmatprep.subr.mxu0 0.0
      %761 = vmatpush1.msra.mxu0 %v749
      %762 = vmatprep.subr.mxu0 0.0
      %763 = vmatpush1.msra.mxu0 %v748
      %764 = vmatprep.subr.mxu0 0.0
      %765 = vmatpush1.msra.mxu0 %v747
      %766 = vmatprep.subr.mxu0 0.0
      %767 = vmatpush1.msra.mxu0 %v746
      %768 = vmatprep.subr.mxu0 0.0
      %769 = vmatpush1.msra.mxu0 %v745
      %770 = vmatprep.subr.mxu0 0.0
      %771 = vmatpush1.msra.mxu0 %v744
      %772 = vmatprep.subr.mxu0 0.0
      %773 = vmatpush1.msra.mxu0 %v743
      %774 = vmatprep.subr.mxu0 0.0
      %775 = vmatpush1.msra.mxu0 %v742
      %776 = vmatprep.subr.mxu0 0.0
      %777 = vmatpush1.msra.mxu0 %v741
      %778 = vmatprep.subr.mxu0 0.0
      %779 = vmatpush1.msra.mxu0 %v740
      %780 = vmatprep.subr.mxu0 0.0
      %781 = vmatpush1.msra.mxu0 %v739
      %782 = vmatprep.subr.mxu0 0.0
      %783 = vmatpush1.msra.mxu0 %v738
      %784 = vmatprep.subr.mxu0 0.0
      %785 = vmatpush1.msra.mxu0 %v737
      %786 = vmatprep.subr.mxu0 0.0
      %787 = vmatpush1.msra.mxu0 %v736
      %788 = vmatprep.subr.mxu0 0.0
      %789 = vmatpush1.msra.mxu0 %v735
      %790 = vmatprep.subr.mxu0 0.0
      %791 = vmatpush2.msra.mxu0 0.0
      %792 = vmatprep.subr.mxu0 0.0
      %793 = vmatpush2.msra.mxu0 0.0
      %794 = vmatprep.subr.mxu0 0.0
      %795 = vmatpush2.msra.mxu0 0.0
      %796 = vmatprep.subr.mxu0 0.0
      %797 = vmatpush2.msra.mxu0 0.0
      %798 = vmatprep.subr.mxu0 0.0
      %799 = vmatpush2.msra.mxu0 0.0
      %800 = vmatprep.subr.mxu0 0.0
      %801 = vmatpush2.msra.mxu0 0.0
      %802 = vmatprep.subr.mxu0 0.0
      %803 = vmatpush2.msra.mxu0 0.0
      %804 = vmatprep.subr.mxu0 0.0
      %805 = vmatpush2.msra.mxu0 0.0
      %806 = vmatprep.subr.mxu0 0.0
      %807 = vmatpush2.msra.mxu0 0.0
      %808 = vmatprep.subr.mxu0 0.0
      %809 = vmatpush2.msra.mxu0 0.0
      %810 = vmatprep.subr.mxu0 0.0
      %811 = vmatpush2.msra.mxu0 0.0
      %812 = vmatprep.subr.mxu0 0.0
      %813 = vmatpush2.msra.mxu0 0.0
      %814 = vmatprep.subr.mxu0 0.0
      %815 = vmatpush2.msra.mxu0 0.0
      %816 = vmatprep.subr.mxu0 0.0
      %817 = vmatpush2.msra.mxu0 0.0
      %818 = vmatprep.subr.mxu0 0.0
      %819 = vmatpush2.msra.mxu0 0.0
      %820 = vmatprep.subr.mxu0 0.0
      %821 = vmatpush2.msra.mxu0 0.0
      %822 = vmatprep.mubr.f32.mxu0 0.0
      %823 = vmatmul.mubr.f32.gmra.mxu0 %v719
      %v824 = vpop.f32.mrf.mxu0
      %v825 = vadd.f32 %v756, %v824
      %v826 = vpop.f32.mrf.mxu0
      %827 = vmatprep.mubr.f32.mxu0 0.0
      %828 = vmatmul.mubr.f32.gmra.mxu0 %v720
      %v829 = vpop.f32.mrf.mxu0
      %v830 = vadd.f32 %v756, %v829
      %v831 = vpop.f32.mrf.mxu0
      %832 = vmatprep.mubr.f32.mxu0 0.0
      %833 = vmatmul.mubr.f32.gmra.mxu0 %v721
      %v834 = vpop.f32.mrf.mxu0
      %v835 = vadd.f32 %v756, %v834
      %v836 = vpop.f32.mrf.mxu0
      %837 = vmatprep.mubr.f32.mxu0 0.0
      %838 = vmatmul.mubr.f32.gmra.mxu0 %v722
      %v839 = vpop.f32.mrf.mxu0
      %v840 = vadd.f32 %v756, %v839
      %v841 = vpop.f32.mrf.mxu0
      %842 = vmatprep.mubr.f32.mxu0 0.0
      %843 = vmatmul.mubr.f32.gmra.mxu0 %v723
      %v844 = vpop.f32.mrf.mxu0
      %v845 = vadd.f32 %v756, %v844
      %v846 = vpop.f32.mrf.mxu0
      %847 = vmatprep.mubr.f32.mxu0 0.0
      %848 = vmatmul.mubr.f32.gmra.mxu0 %v724
      %v849 = vpop.f32.mrf.mxu0
      %v850 = vadd.f32 %v756, %v849
      %v851 = vpop.f32.mrf.mxu0
      %852 = vmatprep.mubr.f32.mxu0 0.0
      %853 = vmatmul.mubr.f32.gmra.mxu0 %v725
      %v854 = vpop.f32.mrf.mxu0
      %v855 = vadd.f32 %v756, %v854
      %v856 = vpop.f32.mrf.mxu0
      %857 = vmatprep.mubr.f32.mxu0 0.0
      %858 = vmatmul.mubr.f32.gmra.mxu0 %v726
      %v859 = vpop.f32.mrf.mxu0
      %v860 = vadd.f32 %v756, %v859
      %v861 = vpop.f32.mrf.mxu0
      %862 = vmatprep.mubr.f32.mxu0 0.0
      %863 = vmatmul.mubr.f32.gmra.mxu0 %v727
      %v864 = vpop.f32.mrf.mxu0
      %v865 = vadd.f32 %v756, %v864
      %v866 = vpop.f32.mrf.mxu0
      %867 = vmatprep.mubr.f32.mxu0 0.0
      %868 = vmatmul.mubr.f32.gmra.mxu0 %v728
      %v869 = vpop.f32.mrf.mxu0
      %v870 = vadd.f32 %v756, %v869
      %v871 = vpop.f32.mrf.mxu0
      %872 = vmatprep.mubr.f32.mxu0 0.0
      %873 = vmatmul.mubr.f32.gmra.mxu0 %v729
      %v874 = vpop.f32.mrf.mxu0
      %v875 = vadd.f32 %v756, %v874
      %v876 = vpop.f32.mrf.mxu0
      %877 = vmatprep.mubr.f32.mxu0 0.0
      %878 = vmatmul.mubr.f32.gmra.mxu0 %v730
      %v879 = vpop.f32.mrf.mxu0
      %v880 = vadd.f32 %v756, %v879
      %v881 = vpop.f32.mrf.mxu0
      %882 = vmatprep.mubr.f32.mxu0 0.0
      %883 = vmatmul.mubr.f32.gmra.mxu0 %v731
      %v884 = vpop.f32.mrf.mxu0
      %v885 = vadd.f32 %v756, %v884
      %v886 = vpop.f32.mrf.mxu0
      %887 = vmatprep.mubr.f32.mxu0 0.0
      %888 = vmatmul.mubr.f32.gmra.mxu0 %v732
      %v889 = vpop.f32.mrf.mxu0
      %v890 = vadd.f32 %v756, %v889
      %v891 = vpop.f32.mrf.mxu0
      %892 = vmatprep.mubr.f32.mxu0 0.0
      %893 = vmatmul.mubr.f32.gmra.mxu0 %v733
      %v894 = vpop.f32.mrf.mxu0
      %v895 = vadd.f32 %v756, %v894
      %v896 = vpop.f32.mrf.mxu0
      %897 = vmatprep.mubr.f32.mxu0 0.0
      %898 = vmatmul.mubr.f32.gmra.mxu0 %v734
      %v899 = vpop.f32.mrf.mxu0
      %v900 = vadd.f32 %v756, %v899
      %v901 = vpop.f32.mrf.mxu0
      %902 = vdwg.mxu0
      %vm903 = vcmask 523264
      %904 = vst.msk [vmem:[%s280] sm:$0xff] %vm903, %v825
      %905 = vst.msk [vmem:[%s280 + $0x8] sm:$0xff] %vm903, %v830
      %906 = vst.msk [vmem:[%s280 + $0x10] sm:$0xff] %vm903, %v835
      %907 = vst.msk [vmem:[%s280 + $0x18] sm:$0xff] %vm903, %v840
      %908 = vst.msk [vmem:[%s280 + $0x20] sm:$0xff] %vm903, %v845
      %909 = vst.msk [vmem:[%s280 + $0x28] sm:$0xff] %vm903, %v850
      %910 = vst.msk [vmem:[%s280 + $0x30] sm:$0xff] %vm903, %v855
      %911 = vst.msk [vmem:[%s280 + $0x38] sm:$0xff] %vm903, %v860
      %912 = vst.msk [vmem:[%s280 + $0x40] sm:$0xff] %vm903, %v865
      %913 = vst.msk [vmem:[%s280 + $0x48] sm:$0xff] %vm903, %v870
      %914 = vst.msk [vmem:[%s280 + $0x50] sm:$0xff] %vm903, %v875
      %915 = vst.msk [vmem:[%s280 + $0x58] sm:$0xff] %vm903, %v880
      %916 = vst.msk [vmem:[%s280 + $0x60] sm:$0xff] %vm903, %v885
      %917 = vst.msk [vmem:[%s280 + $0x68] sm:$0xff] %vm903, %v890
      %918 = vst.msk [vmem:[%s280 + $0x70] sm:$0xff] %vm903, %v895
      %919 = vst.msk [vmem:[%s280 + $0x78] sm:$0xff] %vm903, %v900
      %s920 = smul.u32 16, %s18
      %p921 = scmp.lt.s32.totalorder %s920, 31
      %s922 = scalar_select %p921, %s920, 31
      %s923 = smul.addr %s922, 8
      %s924 = scalar_lea.vmem %s7, %s923
      // Predicated region
      $region49: #{tpu_custom_call.1} parent=47 // pred_check
        %p925 = pneg %p188
      $region50: #{tpu_custom_call.1} parent=47 // pred_check_branch
        %927 = sbr.rel (%p925) target = $region52
      $region51: #{tpu_custom_call.1} parent=47 // pred_region
        %s928 = smul.u32 16, %s18
      $region52: #{tpu_custom_call.1} parent=47 // pred_fallthru
        _
    $region48: #{tpu_custom_call.1} parent=5 // pred_fallthru
      _
    %p929 = scmp.le.s32.totalorder 2, %s13
    // Predicated region
    $region53: #{tpu_custom_call.1} parent=5 // pred_check
      %p930 = pneg %p929
    $region54: #{tpu_custom_call.1} parent=5 // pred_check_branch
      %932 = sbr.rel (%p930) target = $region56
    $region55: #{tpu_custom_call.1} parent=5 // pred_region
      %s933 = ssub.s32 %s13, 2
      // Predicated region
      $region57: #{tpu_custom_call.1} parent=55 // pred_check
        %p934 = pneg %p194
      $region58: #{tpu_custom_call.1} parent=55 // pred_check_branch
        %936 = sbr.rel (%p934) target = $region60
      $region59: #{tpu_custom_call.1} parent=55 // pred_region
        %s937 = smul.u32 16, %s19
        %p938 = scmp.lt.s32.totalorder %s937, 31
        %s939 = scalar_select %p938, %s937, 31
        %s940 = smul.addr %s939, 8
        %s941 = scalar_lea.vmem %s7, %s940
      $region60: #{tpu_custom_call.1} parent=55 // pred_fallthru
        _
    $region56: #{tpu_custom_call.1} parent=5 // pred_fallthru
      _
  $region6: #{tpu_custom_call.1} parent=0 // loop_footer
    %s17 = sadd.s32 1, %s13
  $region7: #{tpu_custom_call.1} parent=0 // loop_footer_branch
    %12 = sbr.rel target = $region3
  $region8: #{tpu_custom_call.1} parent=0 // loop_exit
    _

</llo_original>
